<compile_context>
chip_gen: v7x
topology: tpu7x:2x2x1
jax: 0.10.0
libtpu: 0.0.40
codegen_flags: <defaults>
</compile_context>

<pallas_src>
import functools

import jax
import jax.numpy as jnp
from jax import lax
from jax.experimental import pallas as pl
from jax.experimental.pallas import tpu as pltpu


def _spatial_gather_kernel(probs_ref, feats_ref, out_ref,
                           acc_ref, e_ref, inv_s_ref):
    # probs_ref: (1, K, HW)  resident across the HW grid axis
    # feats_ref: (1, C, THW) current HW tile, native channel-major layout
    # out_ref:   (1, K, C)   resident across the HW grid axis
    # acc_ref:   (K, C) f32, e_ref: (K, HW) MXU dtype, inv_s_ref: (K, 1) f32
    t = pl.program_id(1)

    # Step 0: single-pass softmax statistics over the full probs row.
    @pl.when(t == 0)
    def _init():
        p = probs_ref[0].astype(jnp.float32)            # (K, HW)
        m = jnp.max(p, axis=-1, keepdims=True)          # (K, 1)
        e = jnp.exp(p - m)                              # (K, HW)
        s = jnp.sum(e, axis=-1, keepdims=True)          # (K, 1)
        e_ref[...] = e.astype(e_ref.dtype)              # keep MXU input dtype
        inv_s_ref[...] = pl.reciprocal(s, approx=False)  # only K values
        acc_ref[...] = jnp.zeros_like(acc_ref)

    # Contract this HW tile: (K, THW) x (C, THW) -> (K, C) on the MXU,
    # contracting the last (HW) axes of both operands — no feats transpose.
    thw = feats_ref.shape[-1]
    start = t * thw
    if thw % 128 == 0:
        start = pl.multiple_of(start, 128)
    e_chunk = e_ref[:, pl.ds(start, thw)]               # (K, THW)
    f_chunk = feats_ref[0]                              # (C, THW)
    acc_ref[...] += lax.dot_general(
        e_chunk, f_chunk,
        dimension_numbers=(((1,), (1,)), ((), ())),
        preferred_element_type=jnp.float32)

    # Last HW step: normalize once per batch and emit lane-dense (K, C).
    @pl.when(t == pl.num_programs(1) - 1)
    def _finalize():
        out_ref[0] = (acc_ref[...] * inv_s_ref[...]).astype(out_ref.dtype)


def _pick_hw_tile(hw, max_tile):
    """Largest multiple of 128 that divides hw and is <= max_tile."""
    if hw % 128 != 0 or hw <= max_tile:
        return hw
    for t in range(max_tile - (max_tile % 128), 127, -128):
        if hw % t == 0:
            return t
    return hw


def spatial_gather(feats, probs, *, hw_tile=2048):
    """feats: (bs, c, h, w), probs: (bs, k, h, w) -> (bs, c, k, 1)"""
    bs, c, h, w = feats.shape
    k = probs.shape[1]
    hw = h * w

    # Native layouts — NO transpose of feats through HBM.
    feats_r = feats.reshape(bs, c, hw)   # (bs, c, hw)
    probs_r = probs.reshape(bs, k, hw)   # (bs, k, hw)

    thw = _pick_hw_tile(hw, hw_tile)
    n_hw_tiles = hw // thw

    out = pl.pallas_call(
        _spatial_gather_kernel,
        out_shape=jax.ShapeDtypeStruct((bs, k, c), feats.dtype),
        grid_spec=pltpu.PrefetchScalarGridSpec(
            num_scalar_prefetch=0,
            grid=(bs, n_hw_tiles),
            in_specs=[
                # probs row resident across the HW reduction axis
                pl.BlockSpec((1, k, hw), lambda b, t: (b, 0, 0)),
                # feats tiled over HW in its native channel-major layout
                pl.BlockSpec((1, c, thw), lambda b, t: (b, 0, t)),
            ],
            # output resident across the HW axis (accumulator pattern)
            out_specs=pl.BlockSpec((1, k, c), lambda b, t: (b, 0, 0)),
            scratch_shapes=[
                pltpu.VMEM((k, c), jnp.float32),   # f32 accumulator
                pltpu.VMEM((k, hw), feats.dtype),  # exp(p - max), MXU dtype
                pltpu.VMEM((k, 1), jnp.float32),   # 1 / sum
            ],
        ),
        compiler_params=pltpu.CompilerParams(
            dimension_semantics=("parallel", "arbitrary"),
            vmem_limit_bytes=32 * 1024 * 1024,
        ),
        cost_estimate=pl.CostEstimate(
            flops=2 * bs * k * hw * c,
            transcendentals=bs * k * hw,
            bytes_accessed=(feats.size * feats.dtype.itemsize
                            + probs.size * probs.dtype.itemsize
                            + bs * k * c * feats.dtype.itemsize),
        ),
    )(probs_r, feats_r)                                           # (bs, k, c)

    # permute(0,2,1).unsqueeze(3) — touches only bs*k*c elements.
    return jnp.transpose(out, (0, 2, 1))[..., None]               # (bs, c, k, 1)


def _reference(feats, probs):
    bs, c, h, w = feats.shape
    k = probs.shape[1]
    hw = h * w
    f = jnp.transpose(feats.reshape(bs, c, hw), (0, 2, 1))
    p = jax.nn.softmax(probs.reshape(bs, k, hw), axis=2)
    ctx = jnp.einsum("bkn,bnc->bkc", p, f)
    return jnp.transpose(ctx, (0, 2, 1))[..., None]


if __name__ == "__main__":
    key = jax.random.PRNGKey(0)
    k1, k2 = jax.random.split(key)

    bs, c, h, w = 2, 4, 16, 16
    num_classes = 8

    feats = jax.random.normal(k1, (bs, c, h, w), dtype=jnp.float32)
    probs = jax.random.normal(k2, (bs, num_classes, h, w), dtype=jnp.float32)

    # hw_tile=128 forces HW=256 into 2 reduction steps, exercising the
    # tiled-accumulation path at small test shapes.
    out = spatial_gather(feats, probs, hw_tile=128)
    jax.block_until_ready(out)

    ref = _reference(feats, probs)
    assert out.shape == (bs, c, num_classes, 1), out.shape
    assert jnp.allclose(out, ref, atol=1e-4, rtol=1e-4), "mismatch vs reference"

    print("KERNEL_OK")
</pallas_src>

<mosaic_0001>
module attributes {stable_mosaic.version = 11 : i64} {
  func.func @_spatial_gather_kernel(%arg0: i32, %arg1: i32, %arg2: memref<1x8x256xf32, #tpu.memory_space<vmem>>, %arg3: memref<1x4x128xf32, #tpu.memory_space<vmem>>, %arg4: memref<1x8x4xf32, #tpu.memory_space<vmem>>, %arg5: memref<8x4xf32, #tpu.memory_space<vmem>>, %arg6: memref<8x256xf32, #tpu.memory_space<vmem>>, %arg7: memref<8x1xf32, #tpu.memory_space<vmem>>) attributes {dimension_semantics = [#tpu.dimension_semantics<parallel>, #tpu.dimension_semantics<arbitrary>], iteration_bounds = array<i64: 2, 2>, scalar_prefetch = 0 : i64, scratch_operands = 3 : i64, tpu.core_type = #tpu.core_type<tc>, window_params = [{transform_indices = @transform_0, window_bounds = array<i64: 1, 8, 256>}, {transform_indices = @transform_1, window_bounds = array<i64: 1, 4, 128>}, {transform_indices = @transform_2, window_bounds = array<i64: 1, 8, 4>}]} {
    %c0_i32 = arith.constant 0 : i32
    %0 = arith.cmpi eq, %arg1, %c0_i32 : i32
    %1 = arith.extui %0 : i1 to i32
    %c0_i32_0 = arith.constant 0 : i32
    %2 = arith.cmpi ne, %1, %c0_i32_0 : i32
    scf.if %2 {
      %c0_9 = arith.constant 0 : index
      %c0_10 = arith.constant 0 : index
      %c0_11 = arith.constant 0 : index
      %16 = vector.load %arg2[%c0_9, %c0_10, %c0_11] : memref<1x8x256xf32, #tpu.memory_space<vmem>>, vector<1x8x256xf32>
      %17 = vector.shape_cast %16 : vector<1x8x256xf32> to vector<8x256xf32>
      %cst_12 = arith.constant dense<0xFF800000> : vector<8xf32>
      %18 = vector.multi_reduction <maximumf>, %17, %cst_12 [1] : vector<8x256xf32> to vector<8xf32>
      %19 = vector.shape_cast %18 : vector<8xf32> to vector<8x1xf32>
      %20 = vector.broadcast %19 : vector<8x1xf32> to vector<8x256xf32>
      %21 = arith.subf %17, %20 : vector<8x256xf32>
      %22 = math.exp %21 : vector<8x256xf32>
      %cst_13 = arith.constant dense<0.000000e+00> : vector<8xf32>
      %23 = vector.multi_reduction <add>, %22, %cst_13 [1] : vector<8x256xf32> to vector<8xf32>
      %24 = vector.shape_cast %23 : vector<8xf32> to vector<8x1xf32>
      %c0_14 = arith.constant 0 : index
      %c0_15 = arith.constant 0 : index
      %25 = vector.load %arg6[%c0_14, %c0_15] : memref<8x256xf32, #tpu.memory_space<vmem>>, vector<8x256xf32>
      tpu.vector_store %arg6[%c0_14, %c0_15], %22 {strides = array<i32>} : memref<8x256xf32, #tpu.memory_space<vmem>>, vector<8x256xf32>,
      %26 = tpu.reciprocal %24 : vector<8x1xf32> -> vector<8x1xf32>
      %c0_16 = arith.constant 0 : index
      %c0_17 = arith.constant 0 : index
      %27 = vector.load %arg7[%c0_16, %c0_17] : memref<8x1xf32, #tpu.memory_space<vmem>>, vector<8x1xf32>
      tpu.vector_store %arg7[%c0_16, %c0_17], %26 {strides = array<i32>} : memref<8x1xf32, #tpu.memory_space<vmem>>, vector<8x1xf32>,
      %cst_18 = arith.constant 0.000000e+00 : f32
      %28 = vector.broadcast %cst_18 : f32 to vector<8x4xf32>
      %c0_19 = arith.constant 0 : index
      %c0_20 = arith.constant 0 : index
      %29 = vector.load %arg5[%c0_19, %c0_20] : memref<8x4xf32, #tpu.memory_space<vmem>>, vector<8x4xf32>
      tpu.vector_store %arg5[%c0_19, %c0_20], %28 {strides = array<i32>} : memref<8x4xf32, #tpu.memory_space<vmem>>, vector<8x4xf32>,
    } else {
    }
    %c128_i32 = arith.constant 128 : i32
    %3 = arith.muli %arg1, %c128_i32 : i32
    %4 = tpu.assume_multiple %3, 128 : i32
    %c0 = arith.constant 0 : index
    %5 = arith.index_cast %4 : i32 to index
    %6 = vector.load %arg6[%c0, %5] : memref<8x256xf32, #tpu.memory_space<vmem>>, vector<8x128xf32>
    %c0_1 = arith.constant 0 : index
    %c0_2 = arith.constant 0 : index
    %c0_3 = arith.constant 0 : index
    %7 = vector.load %arg3[%c0_1, %c0_2, %c0_3] : memref<1x4x128xf32, #tpu.memory_space<vmem>>, vector<1x4x128xf32>
    %8 = vector.shape_cast %7 : vector<1x4x128xf32> to vector<4x128xf32>
    %c0_4 = arith.constant 0 : index
    %c0_5 = arith.constant 0 : index
    %9 = vector.load %arg5[%c0_4, %c0_5] : memref<8x4xf32, #tpu.memory_space<vmem>>, vector<8x4xf32>
    %cst = arith.constant dense<0.000000e+00> : vector<8x4xf32>
    %10 = tpu.matmul %6, %8, %cst {dimension_numbers = #tpu.dot_dimension_numbers<[1], [1], [0], [0], [0, 0, 1, 0], [], []>} : vector<8x128xf32>, vector<4x128xf32>, vector<8x4xf32> -> vector<8x4xf32>
    %11 = arith.addf %9, %10 : vector<8x4xf32>
    %c0_6 = arith.constant 0 : index
    %c0_7 = arith.constant 0 : index
    %12 = vector.load %arg5[%c0_6, %c0_7] : memref<8x4xf32, #tpu.memory_space<vmem>>, vector<8x4xf32>
    tpu.vector_store %arg5[%c0_6, %c0_7], %11 {strides = array<i32>} : memref<8x4xf32, #tpu.memory_space<vmem>>, vector<8x4xf32>,
    %c1_i32 = arith.constant 1 : i32
    %13 = arith.cmpi eq, %arg1, %c1_i32 : i32
    %14 = arith.extui %13 : i1 to i32
    %c0_i32_8 = arith.constant 0 : i32
    %15 = arith.cmpi ne, %14, %c0_i32_8 : i32
    scf.if %15 {
      %c0_9 = arith.constant 0 : index
      %c0_10 = arith.constant 0 : index
      %16 = vector.load %arg5[%c0_9, %c0_10] : memref<8x4xf32, #tpu.memory_space<vmem>>, vector<8x4xf32>
      %c0_11 = arith.constant 0 : index
      %c0_12 = arith.constant 0 : index
      %17 = vector.load %arg7[%c0_11, %c0_12] : memref<8x1xf32, #tpu.memory_space<vmem>>, vector<8x1xf32>
      %18 = vector.broadcast %17 : vector<8x1xf32> to vector<8x4xf32>
      %19 = arith.mulf %16, %18 : vector<8x4xf32>
      %c0_13 = arith.constant 0 : index
      %c0_14 = arith.constant 0 : index
      %c0_15 = arith.constant 0 : index
      %20 = vector.load %arg4[%c0_13, %c0_14, %c0_15] : memref<1x8x4xf32, #tpu.memory_space<vmem>>, vector<1x8x4xf32>
      %21 = vector.shape_cast %20 : vector<1x8x4xf32> to vector<8x4xf32>
      %22 = vector.shape_cast %19 : vector<8x4xf32> to vector<1x8x4xf32>
      tpu.vector_store %arg4[%c0_13, %c0_14, %c0_15], %22 {strides = array<i32>} : memref<1x8x4xf32, #tpu.memory_space<vmem>>, vector<1x8x4xf32>,
    } else {
    }
    return
  }
  func.func @transform_0(%arg0: i32, %arg1: i32) -> (i32, i32, i32) {
    %c0_i32 = arith.constant 0 : i32
    %c0_i32_0 = arith.constant 0 : i32
    %c0_i32_1 = arith.constant 0 : i32
    return %arg0, %c0_i32, %c0_i32_0 : i32, i32, i32
  }
  func.func @transform_1(%arg0: i32, %arg1: i32) -> (i32, i32, i32) {
    %c0_i32 = arith.constant 0 : i32
    %c0_i32_0 = arith.constant 0 : i32
    return %arg0, %c0_i32, %arg1 : i32, i32, i32
  }
  func.func @transform_2(%arg0: i32, %arg1: i32) -> (i32, i32, i32) {
    %c0_i32 = arith.constant 0 : i32
    %c0_i32_0 = arith.constant 0 : i32
    %c0_i32_1 = arith.constant 0 : i32
    return %arg0, %c0_i32, %c0_i32_0 : i32, i32, i32
  }
}

</mosaic_0001>

<llo_original>
// kernel: tpu_custom_call.1
$region0: #{tpu_custom_call.1}
  #allocation0 [shape = 'u32[]', space=smem, size = 0x4, offset = 0x4, fixed_abs, tag = 'smem constant byte address 0x4 - core index']
  #allocation1 [shape = 'u32[144,128]{1,0:T(1,128)}', space=vmem, size = 0x12000, scoped, tag = 'internal scratch']
  #allocation2 [shape = 'f32[8,4]{1,0:T(8,128)}', space=vmem, size = 0x1000, scoped, tag = 'scratch operand']
  #allocation3 [shape = 'f32[8,256]{1,0:T(8,128)}', space=vmem, size = 0x2000, scoped, tag = 'scratch operand']
  #allocation4 [shape = 'f32[8,1]{1,0:T(8,128)}', space=vmem, size = 0x1000, scoped, tag = 'scratch operand']
  %s0 = inlined_call_operand.hbm [shape: f32[2,8,256], index: 0, kind: input, shape index: {}]
  %s1 = inlined_call_operand.hbm [shape: f32[2,4,256], index: 1, kind: input, shape index: {}]
  %s2 = inlined_call_operand.vmem [shape: f32[2,8,4], index: 2, kind: output, shape index: {}]
  %s3 = sld [smem:[#allocation0]]
  $region57: #{tpu_custom_call.1} parent=0
    _
  %s5 = ssub.s32 1, %s3
  %s6 = scalar_select 0, %s5, %s3
  $region1: #{tpu_custom_call.1} parent=0
    #allocation5 [shape = 'u8[16384]{0}', space=vmem, size = 0x4000, scoped, tag = 'input window, operand 0']
    #allocation6 [shape = 's32[2]{0}', space=sflag, size = 0x8, scoped, tag = 'scoped memory for tpu_custom_call.1']
    #allocation7 [shape = 'u8[4096]{0}', space=vmem, size = 0x1000, scoped, tag = 'input window, operand 1']
    #allocation8 [shape = 's32[2]{0}', space=sflag, size = 0x8, scoped, tag = 'scoped memory for tpu_custom_call.1']
    %7 = vsyncpa [#allocation6], 0
    %s8 = scalar_lea.sflag [#allocation6], 1
    %9 = vsyncpa %s8, 0
    %10 = vsyncpa [#allocation8], 0
    %s11 = scalar_lea.sflag [#allocation8], 1
    %12 = vsyncpa %s11, 0
    loop: start=0, step=1, limit=6
    $region2: #{tpu_custom_call.1} parent=1 // loop_pre_header
      _
    $region3: #{tpu_custom_call.1} parent=1 // loop_header
      %s14 = sphi 0, %s18
      %p15 = scmp.ge.s32.totalorder %s14, 6
      %s21 = sphi 0, %s33
      %s22 = sphi 0, %s29
      %s23 = sphi 0, %s21
      %s24 = sphi 0, %s22
      %s25 = sphi 0, %s23
      %s26 = sphi 0, %s24
      %s36 = sphi 0, %s38
      %s39 = sphi 0, %s36
      %s40 = sphi 0, %s39
      %s56 = sphi 0, %s40
      %s64 = sphi 0, %s66
      %s67 = sphi 0, %s64
      %s68 = sphi 0, %s67
      %s84 = sphi 0, %s68
      %s90 = sphi 0, %s92
      %s93 = sphi 0, %s90
      %s94 = sphi 0, %s93
      %s110 = sphi 0, %s94
    $region4: #{tpu_custom_call.1} parent=1 // loop_header_branch
      %17 = sbr.rel (%p15) target = $region8
    $region5: #{tpu_custom_call.1} parent=1 // loop_body
      %s19 = ssub.s32 %s14, 1
      %s20 = ssub.s32 %s14, 2
      %s27 = sadd.s32 1, %s22
      %p28 = scmp.ge.s32.totalorder %s27, 2
      %s29 = scalar_select %p28, 0, %s27
      %s30 = sadd.s32 1, %s21
      %s31 = scalar_select %p28, %s30, %s21
      %p32 = scmp.ge.s32.totalorder %s31, 2
      %s33 = scalar_select %p32, 0, %s31
      %s34 = ssub.s32 %s21, %s33
      %p35 = scmp.eq.s32.totalorder %s34, 0
      %s37 = sadd.s32 %s36, 1
      %s38 = scalar_select %p35, %s36, %s37
      %p41 = pneg %p35
      %p42 = scmp.eq.s32.totalorder %s14, 3
      %p43 = por %p41, %p42
      %p44 = scmp.ne.s32.totalorder %s36, %s39
      %p45 = scmp.eq.s32.totalorder %s14, 0
      %p46 = por %p44, %p45
      %p47 = scmp.ne.s32.totalorder %s36, %s39
      %p48 = scmp.eq.s32.totalorder %s19, 3
      %p49 = por %p47, %p48
      %p50 = scmp.ne.s32.totalorder %s39, %s40
      %p51 = scmp.eq.s32.totalorder %s19, 0
      %p52 = por %p50, %p51
      %p53 = scmp.ne.s32.totalorder %s39, %s40
      %p54 = scmp.eq.s32.totalorder %s20, 3
      %p55 = por %p53, %p54
      %p57 = scmp.ne.s32.totalorder %s40, %s56
      %p58 = scmp.eq.s32.totalorder %s20, 0
      %p59 = por %p57, %p58
      %s60 = ssub.s32 %s21, %s33
      %s61 = ssub.s32 %s22, %s29
      %s62 = sor.u32 %s60, %s61
      %p63 = scmp.eq.s32.totalorder %s62, 0
      %s65 = sadd.s32 %s64, 1
      %s66 = scalar_select %p63, %s64, %s65
      %p69 = pneg %p63
      %p70 = scmp.eq.s32.totalorder %s14, 3
      %p71 = por %p69, %p70
      %p72 = scmp.ne.s32.totalorder %s64, %s67
      %p73 = scmp.eq.s32.totalorder %s14, 0
      %p74 = por %p72, %p73
      %p75 = scmp.ne.s32.totalorder %s64, %s67
      %p76 = scmp.eq.s32.totalorder %s19, 3
      %p77 = por %p75, %p76
      %p78 = scmp.ne.s32.totalorder %s67, %s68
      %p79 = scmp.eq.s32.totalorder %s19, 0
      %p80 = por %p78, %p79
      %p81 = scmp.ne.s32.totalorder %s67, %s68
      %p82 = scmp.eq.s32.totalorder %s20, 3
      %p83 = por %p81, %p82
      %p85 = scmp.ne.s32.totalorder %s68, %s84
      %p86 = scmp.eq.s32.totalorder %s20, 0
      %p87 = por %p85, %p86
      %s88 = ssub.s32 %s21, %s33
      %p89 = scmp.eq.s32.totalorder %s88, 0
      %s91 = sadd.s32 %s90, 1
      %s92 = scalar_select %p89, %s90, %s91
      %p95 = pneg %p89
      %p96 = scmp.eq.s32.totalorder %s14, 3
      %p97 = por %p95, %p96
      %p98 = scmp.ne.s32.totalorder %s90, %s93
      %p99 = scmp.eq.s32.totalorder %s14, 0
      %p100 = por %p98, %p99
      %p101 = scmp.ne.s32.totalorder %s90, %s93
      %p102 = scmp.eq.s32.totalorder %s19, 3
      %p103 = por %p101, %p102
      %p104 = scmp.ne.s32.totalorder %s93, %s94
      %p105 = scmp.eq.s32.totalorder %s19, 0
      %p106 = por %p104, %p105
      %p107 = scmp.ne.s32.totalorder %s93, %s94
      %p108 = scmp.eq.s32.totalorder %s20, 3
      %p109 = por %p107, %p108
      %p111 = scmp.ne.s32.totalorder %s94, %s110
      %p112 = scmp.eq.s32.totalorder %s20, 0
      %p113 = por %p111, %p112
      %p114 = scmp.le.s32.totalorder 1, %s14
      %p115 = scmp.lt.s32.totalorder %s14, 5
      %p116 = pnand %p114, %p115
      %p117 = pneg %p116
      // Predicated region
      $region9: #{tpu_custom_call.1} parent=5 // pred_check
        _
      $region10: #{tpu_custom_call.1} parent=5 // pred_check_branch
        %119 = sbr.rel (%p116) target = $region12
      $region11: #{tpu_custom_call.1} parent=5 // pred_region
        %s120 = ssub.s32 %s14, 1
      $region12: #{tpu_custom_call.1} parent=5 // pred_fallthru
        _
      %p121 = scmp.lt.s32.totalorder %s14, 4
      // Predicated region
      $region13: #{tpu_custom_call.1} parent=5 // pred_check
        %p122 = pneg %p121
      $region14: #{tpu_custom_call.1} parent=5 // pred_check_branch
        %124 = sbr.rel (%p122) target = $region16
      $region15: #{tpu_custom_call.1} parent=5 // pred_region
        // Predicated region
        $region17: #{tpu_custom_call.1} parent=15 // pred_check
          %p125 = pneg %p46
        $region18: #{tpu_custom_call.1} parent=15 // pred_check_branch
          %127 = sbr.rel (%p125) target = $region20
        $region19: #{tpu_custom_call.1} parent=15 // pred_region
          %s128 = sand.u32 %s36, 1
          %s129 = scalar_lea.sflag [#allocation6], %s128
          %s130 = sand.u32 %s36, 1
          %s131 = smul.addr %s130, 16
          %s132 = scalar_lea.vmem [#allocation5], %s131
          %s134 = ssub.s32 256, 256
          %135 = vsyncadd %s129, %s134
          %s136 = smul.addr %s21, 2
          %s137 = smul.addr %s136, 128
          %s138 = scalar_lea.hbm %s0, %s137
          %s140 = sshll.u32 %s132, 4
          %s141 = int_to_ptr.vmem [resolvable:$true] %s140
          %143 = dma.hbm_to_vmem [thread:$0]  %s138, 256, %s141, %s129
        $region20: #{tpu_custom_call.1} parent=15 // pred_fallthru
          _
        // Predicated region
        $region21: #{tpu_custom_call.1} parent=15 // pred_check
          %p144 = pneg %p74
        $region22: #{tpu_custom_call.1} parent=15 // pred_check_branch
          %146 = sbr.rel (%p144) target = $region24
        $region23: #{tpu_custom_call.1} parent=15 // pred_region
          %s147 = sand.u32 %s64, 1
          %s148 = scalar_lea.sflag [#allocation8], %s147
          %s149 = sand.u32 %s64, 1
          %s150 = smul.addr %s149, 4
          %s151 = scalar_lea.vmem [#allocation7], %s150
          %s153 = ssub.s32 64, 64
          %154 = vsyncadd %s148, %s153
          %s155 = smul.addr %s21, 2
          %s156 = sadd.s32 %s22, %s155
          %s157 = smul.addr %s156, 64
          %s158 = scalar_lea.hbm %s1, %s157
          %s160 = sshll.u32 %s151, 4
          %s161 = int_to_ptr.vmem [resolvable:$true] %s160
          %163 = dma.hbm_to_vmem [thread:$0]  %s158, 64, %s161, %s148
        $region24: #{tpu_custom_call.1} parent=15 // pred_fallthru
          _
      $region16: #{tpu_custom_call.1} parent=5 // pred_fallthru
        _
      %p164 = scmp.le.s32.totalorder 1, %s14
      %p165 = scmp.lt.s32.totalorder %s14, 5
      %p166 = pnand %p164, %p165
      %p167 = pneg %p166
      // Predicated region
      $region25: #{tpu_custom_call.1} parent=5 // pred_check
        _
      $region26: #{tpu_custom_call.1} parent=5 // pred_check_branch
        %169 = sbr.rel (%p166) target = $region28
      $region27: #{tpu_custom_call.1} parent=5 // pred_region
        %s170 = ssub.s32 %s14, 1
        %s171 = sand.u32 %s39, 1
        %s172 = scalar_lea.sflag [#allocation6], %s171
        %s173 = sand.u32 %s39, 1
        %s174 = smul.addr %s173, 16
        %s175 = scalar_lea.vmem [#allocation5], %s174
        // Predicated region
        $region29: #{tpu_custom_call.1} parent=27 // pred_check
          %p176 = pneg %p52
        $region30: #{tpu_custom_call.1} parent=27 // pred_check_branch
          %178 = sbr.rel (%p176) target = $region32
        $region31: #{tpu_custom_call.1} parent=27 // pred_region
          %179 = dma.done %s172, 256
        $region32: #{tpu_custom_call.1} parent=27 // pred_fallthru
          _
        %s180 = sand.u32 %s67, 1
        %s181 = scalar_lea.sflag [#allocation8], %s180
        %s182 = sand.u32 %s67, 1
        %s183 = smul.addr %s182, 4
        %s184 = scalar_lea.vmem [#allocation7], %s183
        // Predicated region
        $region33: #{tpu_custom_call.1} parent=27 // pred_check
          %p185 = pneg %p80
        $region34: #{tpu_custom_call.1} parent=27 // pred_check_branch
          %187 = sbr.rel (%p185) target = $region36
        $region35: #{tpu_custom_call.1} parent=27 // pred_region
          %188 = dma.done %s181, 64
        $region36: #{tpu_custom_call.1} parent=27 // pred_fallthru
          _
        %s189 = sand.u32 %s39, 1
        %s190 = scalar_lea.sflag [#allocation6], %s189
        %s191 = sand.u32 %s39, 1
        %s192 = smul.addr %s191, 16
        %s193 = scalar_lea.vmem [#allocation5], %s192
        %p194 = pneg %p52
        %p195 = pneg %p49
        %s196 = sand.u32 %s67, 1
        %s197 = scalar_lea.sflag [#allocation8], %s196
        %s198 = sand.u32 %s67, 1
        %s199 = smul.addr %s198, 4
        %s200 = scalar_lea.vmem [#allocation7], %s199
        %p201 = pneg %p80
        %p202 = pneg %p77
        %p203 = pneg %p106
        %p204 = pneg %p103
        %p205 = scmp.lt.s32.totalorder %s23, 1
        %s206 = scalar_select %p205, %s23, 1
        %s207 = smul.addr %s206, 8
        %s208 = scalar_lea.vmem %s2, %s207
        %p209 = scmp.lt.s32.totalorder %s23, 1
        %s210 = scalar_select %p209, %s23, 1
        %s211 = smul.addr %s210, 8
        %s212 = scalar_lea.vmem %s2, %s211
        %p213 = scmp.eq.s32.totalorder %s24, 0
        // Predicated region
        $region37: #{tpu_custom_call.1} parent=27 // pred_check
          %p214 = pneg %p213
        $region38: #{tpu_custom_call.1} parent=27 // pred_check_branch
          %216 = sbr.rel (%p214) target = $region40
        $region39: #{tpu_custom_call.1} parent=27 // pred_region
          %v217 = vld [vmem:[%s175] sm:$0xff]
          %v218 = vld [vmem:[%s175 + $0x8] sm:$0xff]
          %v219 = vmax.f32 %v217, %v218
          %220 = vmax.xlane.f32.xlu0 %v219
          %v221 = vpop.xlane.xlu0 %220
          %v222 = vsub.f32 %v217, %v221
          %v223 = vsub.f32 %v218, %v221
          %v224 = vmul.f32 %v222, 1.442695
          %v225 = vpow.pop %v224
          %v226 = vmul.f32 %v223, 1.442695
          %v227 = vpow.pop %v226
          %v228 = vadd.f32 %v225, %v227
          %229 = vadd.xlane.f32.xlu0 %v228
          %v230 = vpop.xlane.xlu0 %229
          %231 = vst [vmem:[#allocation3] sm:$0xff] %v225
          %232 = vst [vmem:[#allocation3 + $0x8] sm:$0xff] %v227
          %v233 = vrcp.pop %v230
          %vm234 = vcmask 7168
          %235 = vst.msk [vmem:[#allocation4] sm:$0xff] %vm234, %v233
          %vm236 = vcmask 31744
          %237 = vst.msk [vmem:[#allocation2] sm:$0xff] %vm236, 0.0
        $region40: #{tpu_custom_call.1} parent=27 // pred_fallthru
          _
        %s238 = smul.u32 %s24, 128
        %s239 = sshra.s32 %s238, 7
        %s240 = sand.u32 %s238, 127
        %s241 = smul.addr %s239, 8
        %s242 = scalar_lea.vmem [#allocation3], %s241
        %v243 = vld [vmem:[%s242] sm:$0xff]
        %v244 = vld [vmem:[%s184] sm:$0xf]
        %v245 = vld [vmem:[#allocation2] sm:$0xff]
        %246 = vmatprep.subr.mxu0 0.0
        %247 = vmatpush1.xpose.msra.mxu0 %v244
        %248 = vmatprep.subr.mxu0 0.0
        %249 = vmatpush1.xpose.msra.mxu0 0.0
        %250 = vmatprep.subr.mxu0 0.0
        %251 = vmatpush1.xpose.msra.mxu0 0.0
        %252 = vmatprep.subr.mxu0 0.0
        %253 = vmatpush1.xpose.msra.mxu0 0.0
        %254 = vmatprep.subr.mxu0 0.0
        %255 = vmatpush1.xpose.msra.mxu0 0.0
        %256 = vmatprep.subr.mxu0 0.0
        %257 = vmatpush1.xpose.msra.mxu0 0.0
        %258 = vmatprep.subr.mxu0 0.0
        %259 = vmatpush1.xpose.msra.mxu0 0.0
        %260 = vmatprep.subr.mxu0 0.0
        %261 = vmatpush1.xpose.msra.mxu0 0.0
        %262 = vmatprep.subr.mxu0 0.0
        %263 = vmatpush1.xpose.msra.mxu0 0.0
        %264 = vmatprep.subr.mxu0 0.0
        %265 = vmatpush1.xpose.msra.mxu0 0.0
        %266 = vmatprep.subr.mxu0 0.0
        %267 = vmatpush1.xpose.msra.mxu0 0.0
        %268 = vmatprep.subr.mxu0 0.0
        %269 = vmatpush1.xpose.msra.mxu0 0.0
        %270 = vmatprep.subr.mxu0 0.0
        %271 = vmatpush1.xpose.msra.mxu0 0.0
        %272 = vmatprep.subr.mxu0 0.0
        %273 = vmatpush1.xpose.msra.mxu0 0.0
        %274 = vmatprep.subr.mxu0 0.0
        %275 = vmatpush1.xpose.msra.mxu0 0.0
        %276 = vmatprep.subr.mxu0 0.0
        %277 = vmatpush1.xpose.msra.mxu0 0.0
        %278 = vmatprep.subr.mxu0 0.0
        %279 = vmatpush1.xpose.msra.mxu0 0.0
        %280 = vmatprep.subr.mxu0 0.0
        %281 = vmatpush1.xpose.msra.mxu0 0.0
        %282 = vmatprep.subr.mxu0 0.0
        %283 = vmatpush1.xpose.msra.mxu0 0.0
        %284 = vmatprep.subr.mxu0 0.0
        %285 = vmatpush1.xpose.msra.mxu0 0.0
        %286 = vmatprep.subr.mxu0 0.0
        %287 = vmatpush1.xpose.msra.mxu0 0.0
        %288 = vmatprep.subr.mxu0 0.0
        %289 = vmatpush1.xpose.msra.mxu0 0.0
        %290 = vmatprep.subr.mxu0 0.0
        %291 = vmatpush1.xpose.msra.mxu0 0.0
        %292 = vmatprep.subr.mxu0 0.0
        %293 = vmatpush1.xpose.msra.mxu0 0.0
        %294 = vmatprep.subr.mxu0 0.0
        %295 = vmatpush1.xpose.msra.mxu0 0.0
        %296 = vmatprep.subr.mxu0 0.0
        %297 = vmatpush1.xpose.msra.mxu0 0.0
        %298 = vmatprep.subr.mxu0 0.0
        %299 = vmatpush1.xpose.msra.mxu0 0.0
        %300 = vmatprep.subr.mxu0 0.0
        %301 = vmatpush1.xpose.msra.mxu0 0.0
        %302 = vmatprep.subr.mxu0 0.0
        %303 = vmatpush1.xpose.msra.mxu0 0.0
        %304 = vmatprep.subr.mxu0 0.0
        %305 = vmatpush1.xpose.msra.mxu0 0.0
        %306 = vmatprep.subr.mxu0 0.0
        %307 = vmatpush1.xpose.msra.mxu0 0.0
        %308 = vmatprep.subr.mxu0 0.0
        %309 = vmatpush1.xpose.msra.mxu0 0.0
        %310 = vmatprep.mubr.f32.mxu0 0.0
        %311 = vmatmul.mubr.f32.gmra.mrb[0].mxu0 %v243
        %v312 = vpop.f32.mrb[0].mxu0
        %v313 = vadd.f32 0.0, %v312
        %v314 = vpop.f32.mrb[0].mxu0
        %315 = vdwg.mxu0
        %v316 = vadd.f32 %v245, %v313
        %vm317 = vcmask 31744
        %318 = vst.msk [vmem:[#allocation2] sm:$0xff] %vm317, %v316
        %p319 = scmp.eq.s32.totalorder %s24, 1
        // Predicated region
        $region41: #{tpu_custom_call.1} parent=27 // pred_check
          %p320 = pneg %p319
        $region42: #{tpu_custom_call.1} parent=27 // pred_check_branch
          %322 = sbr.rel (%p320) target = $region44
        $region43: #{tpu_custom_call.1} parent=27 // pred_region
          %v323 = vld [vmem:[#allocation2] sm:$0xff]
          %v324 = vld [vmem:[#allocation4] sm:$0xff]
          %326 = vset.pattern.permute.xlu0 0
          %327 = vperm.xlu0 %326, %v324
          %v328 = vpop.permute.xlu0 %327
          %v330 = vmul.f32 %v323, %v328
          %331 = vst.msk [vmem:[%s212] sm:$0xff] %vm317, %v330
        $region44: #{tpu_custom_call.1} parent=27 // pred_fallthru
          _
        %p332 = scmp.lt.s32.totalorder %s23, 1
        %s333 = scalar_select %p332, %s23, 1
        %s334 = smul.addr %s333, 8
        %s335 = scalar_lea.vmem %s2, %s334
        // Predicated region
        $region45: #{tpu_custom_call.1} parent=27 // pred_check
          %p336 = pneg %p103
        $region46: #{tpu_custom_call.1} parent=27 // pred_check_branch
          %338 = sbr.rel (%p336) target = $region48
        $region47: #{tpu_custom_call.1} parent=27 // pred_region
          _
        $region48: #{tpu_custom_call.1} parent=27 // pred_fallthru
          _
      $region28: #{tpu_custom_call.1} parent=5 // pred_fallthru
        _
      %p339 = scmp.le.s32.totalorder 2, %s14
      // Predicated region
      $region49: #{tpu_custom_call.1} parent=5 // pred_check
        %p340 = pneg %p339
      $region50: #{tpu_custom_call.1} parent=5 // pred_check_branch
        %342 = sbr.rel (%p340) target = $region52
      $region51: #{tpu_custom_call.1} parent=5 // pred_region
        %s343 = ssub.s32 %s14, 2
        // Predicated region
        $region53: #{tpu_custom_call.1} parent=51 // pred_check
          %p344 = pneg %p109
        $region54: #{tpu_custom_call.1} parent=51 // pred_check_branch
          %346 = sbr.rel (%p344) target = $region56
        $region55: #{tpu_custom_call.1} parent=51 // pred_region
          %p347 = scmp.lt.s32.totalorder %s25, 1
          %s348 = scalar_select %p347, %s25, 1
          %s349 = smul.addr %s348, 8
          %s350 = scalar_lea.vmem %s2, %s349
        $region56: #{tpu_custom_call.1} parent=51 // pred_fallthru
          _
      $region52: #{tpu_custom_call.1} parent=5 // pred_fallthru
        _
    $region6: #{tpu_custom_call.1} parent=1 // loop_footer
      %s18 = sadd.s32 1, %s14
    $region7: #{tpu_custom_call.1} parent=1 // loop_footer_branch
      %13 = sbr.rel target = $region3
    $region8: #{tpu_custom_call.1} parent=1 // loop_exit
      _
    %351 = vsyncpa [#allocation6], 1
    %s352 = scalar_lea.sflag [#allocation6], 1
    %353 = vsyncpa %s352, 1
    %354 = vsyncpa [#allocation8], 1
    %s355 = scalar_lea.sflag [#allocation8], 1
    %356 = vsyncpa %s355, 1

</llo_original>
